<compile_context>
chip_gen: v7x
topology: tpu7x:2x2x1
jax: 0.10.0
libtpu: 0.0.40
codegen_flags: <defaults>
</compile_context>

<pallas_src>
import jax
import jax.numpy as jnp
from jax.experimental import pallas as pl
from jax.experimental.pallas import tpu as pltpu


LEAKY_SLOPE = 0.01   # nn.LeakyReLU default negative_slope
TILE_B_MAX = 2048    # batch tile cap; see VMEM accounting in the header


def _leaky_relu(x):
    return jnp.where(x > 0, x, LEAKY_SLOPE * x)


def _round_up(x, m):
    return (x + m - 1) // m * m


def _choose_tile_b(B):
    """Batch tile: sublane-aligned, and >= 2 grid steps whenever B >= 16 so a
    v7x dual-TensorCore split has work on both cores."""
    if B <= 8:
        return B                      # block dim == full array dim (allowed)
    half = -(-B // 2)                 # ceil(B / 2)
    return min(TILE_B_MAX, _round_up(half, 8))


def q_kernel(obs_ref, act_ref, w1o_ref, w1a_ref, b1_ref,
             w2_ref, b2_ref, w3_ref, b3_ref, o_ref):
    """One batch tile of the fused Q forward.

    obs_ref : (TB, obs_dim)      act_ref : (TB, act_dim)
    w1o_ref : (obs_dim, H)       w1a_ref : (act_dim, H)    b1_ref : (1, H)
    w2_ref  : (H, H)             b2_ref  : (1, H)
    w3_ref  : (1, H)  (final layer stored as a row)        b3_ref : (1, 1)
    o_ref   : (TB, 1)
    """
    # Layer 1 with the concat fused away: x@W1 == obs@W1_obs + act@W1_act.
    h1 = jnp.dot(obs_ref[...], w1o_ref[...], preferred_element_type=jnp.float32)
    h1 = h1 + jnp.dot(act_ref[...], w1a_ref[...],
                      preferred_element_type=jnp.float32)
    h1 = _leaky_relu(h1 + b1_ref[...])

    # Layer 2.
    h2 = jnp.dot(h1, w2_ref[...], preferred_element_type=jnp.float32) + b2_ref[...]
    h2 = _leaky_relu(h2)

    # Fused L2-normalize + head:
    #   q = rsqrt(sum(h2*h2, -1)) * sum(h2 * w3, -1) + b3
    # No materialized phi, no inv_norm broadcast over H; both lane reductions
    # go to the XLU, rsqrt to the EUP, so the VPU only pays the two products.
    # (No epsilon — all-zero rows give inf/NaN exactly like the PyTorch original.)
    ssq = jnp.sum(h2 * h2, axis=-1, keepdims=True)            # (TB, 1)
    num = jnp.sum(h2 * w3_ref[...], axis=-1, keepdims=True)   # (TB, 1)
    q = jax.lax.rsqrt(ssq) * num + b3_ref[...]
    o_ref[...] = q.astype(o_ref.dtype)


def q_forward(obs, action, params):
    """obs: (B, obs_dim), action: (B, act_dim) -> q: (B,)"""
    obs = obs.astype(jnp.float32)
    action = action.astype(jnp.float32)
    w1o, w1a, b1, w2, b2, w3, b3 = params

    B, obs_dim = obs.shape
    act_dim = action.shape[1]

    # No padding, no input copies: partial last block is masked by Pallas.
    tile_b = _choose_tile_b(B)
    grid = (pl.cdiv(B, tile_b),)

    def batch_spec(cols):
        return pl.BlockSpec((tile_b, cols), lambda i: (i, 0))

    def const_spec(arr):
        return pl.BlockSpec(arr.shape, lambda i: (0, 0))

    out = pl.pallas_call(
        q_kernel,
        out_shape=jax.ShapeDtypeStruct((B, 1), jnp.float32),
        grid=grid,
        in_specs=[
            batch_spec(obs_dim),          # obs tile (double-buffered)
            batch_spec(act_dim),          # action tile (double-buffered)
            const_spec(w1o),              # weights/biases stay resident
            const_spec(w1a),
            const_spec(b1),
            const_spec(w2),
            const_spec(b2),
            const_spec(w3),
            const_spec(b3),
        ],
        out_specs=pl.BlockSpec((tile_b, 1), lambda i: (i, 0)),
        compiler_params=pltpu.CompilerParams(
            dimension_semantics=("parallel",),     # megacore split on v7x
            vmem_limit_bytes=32 * 1024 * 1024),    # uniform across v5e/v6e/v7x
    )(obs, action, w1o, w1a, b1, w2, b2, w3, b3)

    return out.reshape(-1)  # .view(-1)


def init_params(key, obs_dim, action_dim, n_hid):
    """Orthogonal weights over the full concatenated input, zero biases.
    W1 is split into (obs, act) halves so the kernel can fuse the concat;
    W3 is stored as a (1, n_hid) row for the VPU/XLU reduction head."""
    k1, k2, k3 = jax.random.split(key, 3)
    ortho = jax.nn.initializers.orthogonal()
    d_in = obs_dim + action_dim
    w1 = ortho(k1, (d_in, n_hid), jnp.float32)
    w1o, w1a = w1[:obs_dim], w1[obs_dim:]
    b1 = jnp.zeros((1, n_hid), jnp.float32)
    w2 = ortho(k2, (n_hid, n_hid), jnp.float32)
    b2 = jnp.zeros((1, n_hid), jnp.float32)
    w3 = ortho(k3, (n_hid, 1), jnp.float32).reshape(1, n_hid)
    b3 = jnp.zeros((1, 1), jnp.float32)
    return (w1o, w1a, b1, w2, b2, w3, b3)


def q_reference(obs, action, params):
    """Pure-JAX reference (mirrors the PyTorch forward exactly)."""
    w1o, w1a, b1, w2, b2, w3, b3 = params
    x = jnp.concatenate([obs, action], axis=-1)
    w1 = jnp.concatenate([w1o, w1a], axis=0)
    h1 = _leaky_relu(x @ w1 + b1)
    h2 = _leaky_relu(h1 @ w2 + b2)
    phi = h2 / jnp.linalg.norm(h2, axis=1, keepdims=True)
    return (phi @ w3.T + b3).reshape(-1)


if __name__ == "__main__":
    OBS_DIM, ACT_DIM, N_HID = 24, 8, 32

    key = jax.random.PRNGKey(0)
    k_obs, k_act, k_par = jax.random.split(key, 3)
    params = init_params(k_par, OBS_DIM, ACT_DIM, N_HID)

    # Primary small example (B = 8, single tile).
    B = 8
    obs = jax.random.normal(k_obs, (B, OBS_DIM), jnp.float32)
    action = jax.random.normal(k_act, (B, ACT_DIM), jnp.float32)
    out = q_forward(obs, action, params)
    jax.block_until_ready(out)
    ref = q_reference(obs, action, params)
    assert out.shape == (B,)
    assert jnp.allclose(out, ref, atol=1e-5, rtol=1e-5)

    # Ragged batch (B = 12): 2 grid steps, partial (masked) last block.
    B2 = 12
    obs2 = jax.random.normal(jax.random.PRNGKey(1), (B2, OBS_DIM), jnp.float32)
    act2 = jax.random.normal(jax.random.PRNGKey(2), (B2, ACT_DIM), jnp.float32)
    out2 = q_forward(obs2, act2, params)
    jax.block_until_ready(out2)
    ref2 = q_reference(obs2, act2, params)
    assert out2.shape == (B2,)
    assert jnp.allclose(out2, ref2, atol=1e-5, rtol=1e-5)

    # Larger non-multiple-of-8 batch: exercises multi-vreg tiles + masking.
    B3 = 300
    obs3 = jax.random.normal(jax.random.PRNGKey(3), (B3, OBS_DIM), jnp.float32)
    act3 = jax.random.normal(jax.random.PRNGKey(4), (B3, ACT_DIM), jnp.float32)
    out3 = q_forward(obs3, act3, params)
    jax.block_until_ready(out3)
    ref3 = q_reference(obs3, act3, params)
    assert out3.shape == (B3,)
    assert jnp.allclose(out3, ref3, atol=1e-5, rtol=1e-5)

    print("KERNEL_OK")
</pallas_src>

<mosaic_0001>
module attributes {stable_mosaic.version = 11 : i64} {
  func.func @q_kernel(%arg0: i32, %arg1: memref<8x24xf32, #tpu.memory_space<vmem>>, %arg2: memref<8x8xf32, #tpu.memory_space<vmem>>, %arg3: memref<24x32xf32, #tpu.memory_space<vmem>>, %arg4: memref<8x32xf32, #tpu.memory_space<vmem>>, %arg5: memref<1x32xf32, #tpu.memory_space<vmem>>, %arg6: memref<32x32xf32, #tpu.memory_space<vmem>>, %arg7: memref<1x32xf32, #tpu.memory_space<vmem>>, %arg8: memref<1x32xf32, #tpu.memory_space<vmem>>, %arg9: memref<1x1xf32, #tpu.memory_space<vmem>>, %arg10: memref<8x1xf32, #tpu.memory_space<vmem>>) attributes {dimension_semantics = [#tpu.dimension_semantics<parallel>], iteration_bounds = array<i64: 1>, scalar_prefetch = 0 : i64, scratch_operands = 0 : i64, tpu.core_type = #tpu.core_type<tc>, window_params = [{transform_indices = @transform_0, window_bounds = array<i64: 8, 24>}, {transform_indices = @transform_1, window_bounds = array<i64: 8, 8>}, {pipeline_mode = #tpu.pipeline_mode<synchronous>, transform_indices = @transform_2, window_bounds = array<i64: 24, 32>}, {pipeline_mode = #tpu.pipeline_mode<synchronous>, transform_indices = @transform_3, window_bounds = array<i64: 8, 32>}, {pipeline_mode = #tpu.pipeline_mode<synchronous>, transform_indices = @transform_4, window_bounds = array<i64: 1, 32>}, {pipeline_mode = #tpu.pipeline_mode<synchronous>, transform_indices = @transform_5, window_bounds = array<i64: 32, 32>}, {pipeline_mode = #tpu.pipeline_mode<synchronous>, transform_indices = @transform_6, window_bounds = array<i64: 1, 32>}, {pipeline_mode = #tpu.pipeline_mode<synchronous>, transform_indices = @transform_7, window_bounds = array<i64: 1, 32>}, {pipeline_mode = #tpu.pipeline_mode<synchronous>, transform_indices = @transform_8, window_bounds = array<i64: 1, 1>}, {transform_indices = @transform_9, window_bounds = array<i64: 8, 1>}]} {
    %c0 = arith.constant 0 : index
    %c0_0 = arith.constant 0 : index
    %0 = vector.load %arg1[%c0, %c0_0] : memref<8x24xf32, #tpu.memory_space<vmem>>, vector<8x24xf32>
    %c0_1 = arith.constant 0 : index
    %c0_2 = arith.constant 0 : index
    %1 = vector.load %arg3[%c0_1, %c0_2] : memref<24x32xf32, #tpu.memory_space<vmem>>, vector<24x32xf32>
    %cst = arith.constant dense<0.000000e+00> : vector<8x32xf32>
    %2 = tpu.matmul %0, %1, %cst {dimension_numbers = #tpu.dot_dimension_numbers<[1], [0], [0], [1], [0, 0, 1, 1], [], []>} : vector<8x24xf32>, vector<24x32xf32>, vector<8x32xf32> -> vector<8x32xf32>
    %c0_3 = arith.constant 0 : index
    %c0_4 = arith.constant 0 : index
    %3 = vector.load %arg2[%c0_3, %c0_4] : memref<8x8xf32, #tpu.memory_space<vmem>>, vector<8x8xf32>
    %c0_5 = arith.constant 0 : index
    %c0_6 = arith.constant 0 : index
    %4 = vector.load %arg4[%c0_5, %c0_6] : memref<8x32xf32, #tpu.memory_space<vmem>>, vector<8x32xf32>
    %cst_7 = arith.constant dense<0.000000e+00> : vector<8x32xf32>
    %5 = tpu.matmul %3, %4, %cst_7 {dimension_numbers = #tpu.dot_dimension_numbers<[1], [0], [0], [1], [0, 0, 1, 1], [], []>} : vector<8x8xf32>, vector<8x32xf32>, vector<8x32xf32> -> vector<8x32xf32>
    %6 = arith.addf %2, %5 : vector<8x32xf32>
    %c0_8 = arith.constant 0 : index
    %c0_9 = arith.constant 0 : index
    %7 = vector.load %arg5[%c0_8, %c0_9] : memref<1x32xf32, #tpu.memory_space<vmem>>, vector<1x32xf32>
    %8 = vector.broadcast %7 : vector<1x32xf32> to vector<8x32xf32>
    %9 = arith.addf %6, %8 : vector<8x32xf32>
    %cst_10 = arith.constant 0.000000e+00 : f32
    %10 = vector.broadcast %cst_10 : f32 to vector<8x32xf32>
    %11 = arith.cmpf ogt, %9, %10 : vector<8x32xf32>
    %cst_11 = arith.constant 0.00999999977 : f32
    %12 = vector.broadcast %cst_11 : f32 to vector<8x32xf32>
    %13 = arith.mulf %12, %9 : vector<8x32xf32>
    %14 = arith.select %11, %9, %13 : vector<8x32xi1>, vector<8x32xf32>
    %c0_12 = arith.constant 0 : index
    %c0_13 = arith.constant 0 : index
    %15 = vector.load %arg6[%c0_12, %c0_13] : memref<32x32xf32, #tpu.memory_space<vmem>>, vector<32x32xf32>
    %cst_14 = arith.constant dense<0.000000e+00> : vector<8x32xf32>
    %16 = tpu.matmul %14, %15, %cst_14 {dimension_numbers = #tpu.dot_dimension_numbers<[1], [0], [0], [1], [0, 0, 1, 1], [], []>} : vector<8x32xf32>, vector<32x32xf32>, vector<8x32xf32> -> vector<8x32xf32>
    %c0_15 = arith.constant 0 : index
    %c0_16 = arith.constant 0 : index
    %17 = vector.load %arg7[%c0_15, %c0_16] : memref<1x32xf32, #tpu.memory_space<vmem>>, vector<1x32xf32>
    %18 = vector.broadcast %17 : vector<1x32xf32> to vector<8x32xf32>
    %19 = arith.addf %16, %18 : vector<8x32xf32>
    %cst_17 = arith.constant 0.000000e+00 : f32
    %20 = vector.broadcast %cst_17 : f32 to vector<8x32xf32>
    %21 = arith.cmpf ogt, %19, %20 : vector<8x32xf32>
    %cst_18 = arith.constant 0.00999999977 : f32
    %22 = vector.broadcast %cst_18 : f32 to vector<8x32xf32>
    %23 = arith.mulf %22, %19 : vector<8x32xf32>
    %24 = arith.select %21, %19, %23 : vector<8x32xi1>, vector<8x32xf32>
    %25 = arith.mulf %24, %24 : vector<8x32xf32>
    %cst_19 = arith.constant dense<0.000000e+00> : vector<8xf32>
    %26 = vector.multi_reduction <add>, %25, %cst_19 [1] : vector<8x32xf32> to vector<8xf32>
    %27 = vector.shape_cast %26 : vector<8xf32> to vector<8x1xf32>
    %c0_20 = arith.constant 0 : index
    %c0_21 = arith.constant 0 : index
    %28 = vector.load %arg8[%c0_20, %c0_21] : memref<1x32xf32, #tpu.memory_space<vmem>>, vector<1x32xf32>
    %29 = vector.broadcast %28 : vector<1x32xf32> to vector<8x32xf32>
    %30 = arith.mulf %24, %29 : vector<8x32xf32>
    %cst_22 = arith.constant dense<0.000000e+00> : vector<8xf32>
    %31 = vector.multi_reduction <add>, %30, %cst_22 [1] : vector<8x32xf32> to vector<8xf32>
    %32 = vector.shape_cast %31 : vector<8xf32> to vector<8x1xf32>
    %33 = math.rsqrt %27 : vector<8x1xf32>
    %34 = arith.mulf %33, %32 : vector<8x1xf32>
    %c0_23 = arith.constant 0 : index
    %c0_24 = arith.constant 0 : index
    %35 = vector.load %arg9[%c0_23, %c0_24] : memref<1x1xf32, #tpu.memory_space<vmem>>, vector<1x1xf32>
    %36 = vector.broadcast %35 : vector<1x1xf32> to vector<8x1xf32>
    %37 = arith.addf %34, %36 : vector<8x1xf32>
    %c0_25 = arith.constant 0 : index
    %c0_26 = arith.constant 0 : index
    %38 = vector.load %arg10[%c0_25, %c0_26] : memref<8x1xf32, #tpu.memory_space<vmem>>, vector<8x1xf32>
    tpu.vector_store %arg10[%c0_25, %c0_26], %37 {strides = array<i32>} : memref<8x1xf32, #tpu.memory_space<vmem>>, vector<8x1xf32>,
    return
  }
  func.func @transform_0(%arg0: i32) -> (i32, i32) {
    %c0_i32 = arith.constant 0 : i32
    %c0_i32_0 = arith.constant 0 : i32
    return %arg0, %c0_i32 : i32, i32
  }
  func.func @transform_1(%arg0: i32) -> (i32, i32) {
    %c0_i32 = arith.constant 0 : i32
    %c0_i32_0 = arith.constant 0 : i32
    return %arg0, %c0_i32 : i32, i32
  }
  func.func @transform_2(%arg0: i32) -> (i32, i32) {
    %c0_i32 = arith.constant 0 : i32
    %c0_i32_0 = arith.constant 0 : i32
    %c0_i32_1 = arith.constant 0 : i32
    return %c0_i32, %c0_i32_0 : i32, i32
  }
  func.func @transform_3(%arg0: i32) -> (i32, i32) {
    %c0_i32 = arith.constant 0 : i32
    %c0_i32_0 = arith.constant 0 : i32
    %c0_i32_1 = arith.constant 0 : i32
    return %c0_i32, %c0_i32_0 : i32, i32
  }
  func.func @transform_4(%arg0: i32) -> (i32, i32) {
    %c0_i32 = arith.constant 0 : i32
    %c0_i32_0 = arith.constant 0 : i32
    %c0_i32_1 = arith.constant 0 : i32
    return %c0_i32, %c0_i32_0 : i32, i32
  }
  func.func @transform_5(%arg0: i32) -> (i32, i32) {
    %c0_i32 = arith.constant 0 : i32
    %c0_i32_0 = arith.constant 0 : i32
    %c0_i32_1 = arith.constant 0 : i32
    return %c0_i32, %c0_i32_0 : i32, i32
  }
  func.func @transform_6(%arg0: i32) -> (i32, i32) {
    %c0_i32 = arith.constant 0 : i32
    %c0_i32_0 = arith.constant 0 : i32
    %c0_i32_1 = arith.constant 0 : i32
    return %c0_i32, %c0_i32_0 : i32, i32
  }
  func.func @transform_7(%arg0: i32) -> (i32, i32) {
    %c0_i32 = arith.constant 0 : i32
    %c0_i32_0 = arith.constant 0 : i32
    %c0_i32_1 = arith.constant 0 : i32
    return %c0_i32, %c0_i32_0 : i32, i32
  }
  func.func @transform_8(%arg0: i32) -> (i32, i32) {
    %c0_i32 = arith.constant 0 : i32
    %c0_i32_0 = arith.constant 0 : i32
    %c0_i32_1 = arith.constant 0 : i32
    return %c0_i32, %c0_i32_0 : i32, i32
  }
  func.func @transform_9(%arg0: i32) -> (i32, i32) {
    %c0_i32 = arith.constant 0 : i32
    %c0_i32_0 = arith.constant 0 : i32
    return %arg0, %c0_i32 : i32, i32
  }
}

</mosaic_0001>

<llo_original>
// kernel: tpu_custom_call.1
$region0: #{tpu_custom_call.1}
  #allocation0 [shape = 'u32[]', space=smem, size = 0x4, offset = 0x4, fixed_abs, tag = 'smem constant byte address 0x4 - core index']
  #allocation1 [shape = 'u32[144,128]{1,0:T(1,128)}', space=vmem, size = 0x12000, scoped, tag = 'internal scratch']
  #allocation2 [shape = 'f32[1,1]{1,0:T(1,128)S(1)}', space=vmem, size = 0x200, scoped, tag = 'scoped memory for tpu_custom_call.1']
  %s0 = inlined_call_operand.hbm [shape: f32[8,24], index: 0, kind: input, shape index: {}]
  %s1 = inlined_call_operand.hbm [shape: f32[8,8], index: 1, kind: input, shape index: {}]
  %s2 = inlined_call_operand.hbm [shape: f32[24,32], index: 2, kind: input, shape index: {}]
  %s3 = inlined_call_operand.vmem [shape: f32[8,32], index: 3, kind: input, shape index: {}]
  %s4 = inlined_call_operand.vmem [shape: f32[1,32], index: 4, kind: input, shape index: {}]
  %s5 = inlined_call_operand.hbm [shape: f32[32,32], index: 5, kind: input, shape index: {}]
  %s6 = inlined_call_operand.vmem [shape: f32[1,32], index: 6, kind: input, shape index: {}]
  %s7 = inlined_call_operand.vmem [shape: f32[1,32], index: 7, kind: input, shape index: {}]
  %s8 = inlined_call_operand.<no memory space> [shape: f32[1,1], index: 8, kind: input, shape index: {}]
  %s9 = inlined_call_operand.vmem [shape: f32[8,1], index: 9, kind: output, shape index: {}]
  %s10 = sld [smem:[#allocation0]]
  $region62: #{tpu_custom_call.1} parent=0
    _
  %s12 = ssub.s32 1, %s10
  %s13 = scalar_select 0, %s12, %s10
  %v14 = vstv %s8
  %15 = vst [vmem:[#allocation2] sm:$0x1] %v14
  $region1: #{tpu_custom_call.1} parent=0
    #allocation3 [shape = 'u8[4096]{0}', space=vmem, size = 0x1000, scoped, tag = 'input window, operand 0, single buffered']
    #allocation4 [shape = 's32[1]{0}', space=sflag, size = 0x4, scoped, tag = 'scoped memory for tpu_custom_call.1']
    #allocation5 [shape = 'u8[4096]{0}', space=vmem, size = 0x1000, scoped, tag = 'input window, operand 1, single buffered']
    #allocation6 [shape = 's32[1]{0}', space=sflag, size = 0x4, scoped, tag = 'scoped memory for tpu_custom_call.1']
    #allocation7 [shape = 'u8[12288]{0}', space=vmem, size = 0x3000, scoped, tag = 'input window, operand 2, single buffered']
    #allocation8 [shape = 'u8[16384]{0}', space=vmem, size = 0x4000, scoped, tag = 'input window, operand 5, single buffered']
    #allocation9 [shape = 's32[1]{0}', space=sflag, size = 0x4, scoped, tag = 'scoped memory for tpu_custom_call.1']
    %16 = vsyncpa [#allocation4], 0
    %17 = vsyncpa [#allocation6], 0
    %18 = vsyncpa [#allocation9], 0
    // Predicated region
    $region2: #{tpu_custom_call.1} parent=1 // pred_check
      _
    $region3: #{tpu_custom_call.1} parent=1 // pred_check_branch
      %20 = sbr.rel (0) target = $region5
    $region4: #{tpu_custom_call.1} parent=1 // pred_region
      %s22 = ssub.s32 128, 128
      %23 = vsyncadd [#allocation4], %s22
      %s25 = sshll.u32 [#allocation3], 4
      %s26 = int_to_ptr.vmem [resolvable:$true] %s25
      %28 = dma.hbm_to_vmem [thread:$0]  %s0, 128, %s26, [#allocation4]
    $region5: #{tpu_custom_call.1} parent=1 // pred_fallthru
      _
    // Predicated region
    $region6: #{tpu_custom_call.1} parent=1 // pred_check
      _
    $region7: #{tpu_custom_call.1} parent=1 // pred_check_branch
      %30 = sbr.rel (0) target = $region9
    $region8: #{tpu_custom_call.1} parent=1 // pred_region
      %s32 = ssub.s32 128, 128
      %33 = vsyncadd [#allocation6], %s32
      %s35 = sshll.u32 [#allocation5], 4
      %s36 = int_to_ptr.vmem [resolvable:$true] %s35
      %38 = dma.hbm_to_vmem [thread:$0]  %s1, 128, %s36, [#allocation6]
    $region9: #{tpu_custom_call.1} parent=1 // pred_fallthru
      _
    // Predicated region
    $region10: #{tpu_custom_call.1} parent=1 // pred_check
      _
    $region11: #{tpu_custom_call.1} parent=1 // pred_check_branch
      %40 = sbr.rel (0) target = $region13
    $region12: #{tpu_custom_call.1} parent=1 // pred_region
      %s42 = ssub.s32 384, 384
      %43 = vsyncadd [#allocation6], %s42
      %s44 = sshll.u32 [#allocation7], 4
      %s45 = int_to_ptr.vmem [resolvable:$true] %s44
      %50 = dma.hbm_to_vmem [thread:$0]  %s2, 384, %s45, [#allocation6], 128, 128, 8
    $region13: #{tpu_custom_call.1} parent=1 // pred_fallthru
      _
    // Predicated region
    $region14: #{tpu_custom_call.1} parent=1 // pred_check
      _
    $region15: #{tpu_custom_call.1} parent=1 // pred_check_branch
      %52 = sbr.rel (0) target = $region17
    $region16: #{tpu_custom_call.1} parent=1 // pred_region
      _
    $region17: #{tpu_custom_call.1} parent=1 // pred_fallthru
      _
    // Predicated region
    $region18: #{tpu_custom_call.1} parent=1 // pred_check
      _
    $region19: #{tpu_custom_call.1} parent=1 // pred_check_branch
      %54 = sbr.rel (0) target = $region21
    $region20: #{tpu_custom_call.1} parent=1 // pred_region
      _
    $region21: #{tpu_custom_call.1} parent=1 // pred_fallthru
      _
    // Predicated region
    $region22: #{tpu_custom_call.1} parent=1 // pred_check
      _
    $region23: #{tpu_custom_call.1} parent=1 // pred_check_branch
      %56 = sbr.rel (0) target = $region25
    $region24: #{tpu_custom_call.1} parent=1 // pred_region
      %s58 = ssub.s32 512, 512
      %59 = vsyncadd [#allocation9], %s58
      %s60 = sshll.u32 [#allocation8], 4
      %s61 = int_to_ptr.vmem [resolvable:$true] %s60
      %66 = dma.hbm_to_vmem [thread:$0]  %s5, 512, %s61, [#allocation9], 128, 128, 8
    $region25: #{tpu_custom_call.1} parent=1 // pred_fallthru
      _
    // Predicated region
    $region26: #{tpu_custom_call.1} parent=1 // pred_check
      _
    $region27: #{tpu_custom_call.1} parent=1 // pred_check_branch
      %68 = sbr.rel (0) target = $region29
    $region28: #{tpu_custom_call.1} parent=1 // pred_region
      _
    $region29: #{tpu_custom_call.1} parent=1 // pred_fallthru
      _
    // Predicated region
    $region30: #{tpu_custom_call.1} parent=1 // pred_check
      _
    $region31: #{tpu_custom_call.1} parent=1 // pred_check_branch
      %70 = sbr.rel (0) target = $region33
    $region32: #{tpu_custom_call.1} parent=1 // pred_region
      _
    $region33: #{tpu_custom_call.1} parent=1 // pred_fallthru
      _
    // Predicated region
    $region34: #{tpu_custom_call.1} parent=1 // pred_check
      _
    $region35: #{tpu_custom_call.1} parent=1 // pred_check_branch
      %72 = sbr.rel (0) target = $region37
    $region36: #{tpu_custom_call.1} parent=1 // pred_region
      _
    $region37: #{tpu_custom_call.1} parent=1 // pred_fallthru
      _
    // Predicated region
    $region38: #{tpu_custom_call.1} parent=1 // pred_check
      _
    $region39: #{tpu_custom_call.1} parent=1 // pred_check_branch
      %74 = sbr.rel (0) target = $region41
    $region40: #{tpu_custom_call.1} parent=1 // pred_region
      %75 = dma.done [#allocation4], 128
    $region41: #{tpu_custom_call.1} parent=1 // pred_fallthru
      _
    // Predicated region
    $region42: #{tpu_custom_call.1} parent=1 // pred_check
      _
    $region43: #{tpu_custom_call.1} parent=1 // pred_check_branch
      %77 = sbr.rel (0) target = $region45
    $region44: #{tpu_custom_call.1} parent=1 // pred_region
      %78 = dma.done [#allocation6], 128
    $region45: #{tpu_custom_call.1} parent=1 // pred_fallthru
      _
    // Predicated region
    $region46: #{tpu_custom_call.1} parent=1 // pred_check
      _
    $region47: #{tpu_custom_call.1} parent=1 // pred_check_branch
      %80 = sbr.rel (0) target = $region49
    $region48: #{tpu_custom_call.1} parent=1 // pred_region
      %81 = dma.done [#allocation6], 384
    $region49: #{tpu_custom_call.1} parent=1 // pred_fallthru
      _
    // Predicated region
    $region50: #{tpu_custom_call.1} parent=1 // pred_check
      _
    $region51: #{tpu_custom_call.1} parent=1 // pred_check_branch
      %83 = sbr.rel (0) target = $region53
    $region52: #{tpu_custom_call.1} parent=1 // pred_region
      %84 = dma.done [#allocation9], 512
    $region53: #{tpu_custom_call.1} parent=1 // pred_fallthru
      _
    %v85 = vld [vmem:[#allocation3] sm:$0xff]
    %v86 = vld [vmem:[#allocation7] sm:$0xff]
    %v87 = vld [vmem:[#allocation7 + $0x8] sm:$0xff]
    %v88 = vld [vmem:[#allocation7 + $0x10] sm:$0xff]
    %v89 = vld [vmem:[#allocation5] sm:$0xff]
    %v90 = vld [vmem:[%s3] sm:$0xff]
    %vm91 = vcmask 64512
    %v93 = vsel %vm91, %v89, 0
    %95 = vmatprep.subr.mxu0 0.0
    %96 = vmatpush1.msra.mxu0 %v90
    %97 = vmatprep.subr.mxu0 0.0
    %98 = vmatpush1.msra.mxu0 0.0
    %99 = vmatprep.subr.mxu0 0.0
    %100 = vmatpush1.msra.mxu0 0.0
    %101 = vmatprep.subr.mxu0 0.0
    %102 = vmatpush1.msra.mxu0 0.0
    %103 = vmatprep.subr.mxu0 0.0
    %104 = vmatpush1.msra.mxu0 0.0
    %105 = vmatprep.subr.mxu0 0.0
    %106 = vmatpush1.msra.mxu0 0.0
    %107 = vmatprep.subr.mxu0 0.0
    %108 = vmatpush1.msra.mxu0 0.0
    %109 = vmatprep.subr.mxu0 0.0
    %110 = vmatpush1.msra.mxu0 0.0
    %111 = vmatprep.subr.mxu0 0.0
    %112 = vmatpush1.msra.mxu0 0.0
    %113 = vmatprep.subr.mxu0 0.0
    %114 = vmatpush1.msra.mxu0 0.0
    %115 = vmatprep.subr.mxu0 0.0
    %116 = vmatpush1.msra.mxu0 0.0
    %117 = vmatprep.subr.mxu0 0.0
    %118 = vmatpush1.msra.mxu0 0.0
    %119 = vmatprep.subr.mxu0 0.0
    %120 = vmatpush1.msra.mxu0 0.0
    %121 = vmatprep.subr.mxu0 0.0
    %122 = vmatpush1.msra.mxu0 0.0
    %123 = vmatprep.subr.mxu0 0.0
    %124 = vmatpush1.msra.mxu0 0.0
    %125 = vmatprep.subr.mxu0 0.0
    %126 = vmatpush1.msra.mxu0 0.0
    %127 = vmatprep.subr.mxu0 0.0
    %128 = vmatpush1.msra.mxu0 0.0
    %129 = vmatprep.subr.mxu0 0.0
    %130 = vmatpush1.msra.mxu0 0.0
    %131 = vmatprep.subr.mxu0 0.0
    %132 = vmatpush1.msra.mxu0 0.0
    %133 = vmatprep.subr.mxu0 0.0
    %134 = vmatpush1.msra.mxu0 0.0
    %135 = vmatprep.subr.mxu0 0.0
    %136 = vmatpush1.msra.mxu0 0.0
    %137 = vmatprep.subr.mxu0 0.0
    %138 = vmatpush1.msra.mxu0 0.0
    %139 = vmatprep.subr.mxu0 0.0
    %140 = vmatpush1.msra.mxu0 0.0
    %141 = vmatprep.subr.mxu0 0.0
    %142 = vmatpush1.msra.mxu0 0.0
    %143 = vmatprep.subr.mxu0 0.0
    %144 = vmatpush1.msra.mxu0 0.0
    %145 = vmatprep.subr.mxu0 0.0
    %146 = vmatpush1.msra.mxu0 0.0
    %147 = vmatprep.subr.mxu0 0.0
    %148 = vmatpush1.msra.mxu0 0.0
    %149 = vmatprep.subr.mxu0 0.0
    %150 = vmatpush1.msra.mxu0 0.0
    %151 = vmatprep.subr.mxu0 0.0
    %152 = vmatpush1.msra.mxu0 0.0
    %153 = vmatprep.subr.mxu0 0.0
    %154 = vmatpush1.msra.mxu0 0.0
    %155 = vmatprep.subr.mxu0 0.0
    %156 = vmatpush1.msra.mxu0 0.0
    %157 = vmatprep.subr.mxu0 0.0
    %158 = vmatpush1.msra.mxu0 0.0
    %159 = vmatprep.mubr.f32.mxu0 0.0
    %160 = vmatmul.mubr.f32.gmra.mrb[0].mxu0 %v93
    %v161 = vpop.f32.mrb[0].mxu0
    %v162 = vadd.f32 0.0, %v161
    %v163 = vpop.f32.mrb[0].mxu0
    %164 = vdwg.mxu0
    %vm165 = vcmask 195584
    %v167 = vsel %vm165, %v85, 0
    %169 = vmatprep.subr.mxu0 0.0
    %170 = vmatpush1.msra.mxu0 %v86
    %171 = vmatprep.subr.mxu0 0.0
    %172 = vmatpush1.msra.mxu0 %v87
    %173 = vmatprep.subr.mxu0 0.0
    %174 = vmatpush1.msra.mxu0 %v88
    %175 = vmatprep.subr.mxu0 0.0
    %176 = vmatpush1.msra.mxu0 0.0
    %177 = vmatprep.subr.mxu0 0.0
    %178 = vmatpush1.msra.mxu0 0.0
    %179 = vmatprep.subr.mxu0 0.0
    %180 = vmatpush1.msra.mxu0 0.0
    %181 = vmatprep.subr.mxu0 0.0
    %182 = vmatpush1.msra.mxu0 0.0
    %183 = vmatprep.subr.mxu0 0.0
    %184 = vmatpush1.msra.mxu0 0.0
    %185 = vmatprep.subr.mxu0 0.0
    %186 = vmatpush1.msra.mxu0 0.0
    %187 = vmatprep.subr.mxu0 0.0
    %188 = vmatpush1.msra.mxu0 0.0
    %189 = vmatprep.subr.mxu0 0.0
    %190 = vmatpush1.msra.mxu0 0.0
    %191 = vmatprep.subr.mxu0 0.0
    %192 = vmatpush1.msra.mxu0 0.0
    %193 = vmatprep.subr.mxu0 0.0
    %194 = vmatpush1.msra.mxu0 0.0
    %195 = vmatprep.subr.mxu0 0.0
    %196 = vmatpush1.msra.mxu0 0.0
    %197 = vmatprep.subr.mxu0 0.0
    %198 = vmatpush1.msra.mxu0 0.0
    %199 = vmatprep.subr.mxu0 0.0
    %200 = vmatpush1.msra.mxu0 0.0
    %201 = vmatprep.subr.mxu0 0.0
    %202 = vmatpush1.msra.mxu0 0.0
    %203 = vmatprep.subr.mxu0 0.0
    %204 = vmatpush1.msra.mxu0 0.0
    %205 = vmatprep.subr.mxu0 0.0
    %206 = vmatpush1.msra.mxu0 0.0
    %207 = vmatprep.subr.mxu0 0.0
    %208 = vmatpush1.msra.mxu0 0.0
    %209 = vmatprep.subr.mxu0 0.0
    %210 = vmatpush1.msra.mxu0 0.0
    %211 = vmatprep.subr.mxu0 0.0
    %212 = vmatpush1.msra.mxu0 0.0
    %213 = vmatprep.subr.mxu0 0.0
    %214 = vmatpush1.msra.mxu0 0.0
    %215 = vmatprep.subr.mxu0 0.0
    %216 = vmatpush1.msra.mxu0 0.0
    %217 = vmatprep.subr.mxu0 0.0
    %218 = vmatpush1.msra.mxu0 0.0
    %219 = vmatprep.subr.mxu0 0.0
    %220 = vmatpush1.msra.mxu0 0.0
    %221 = vmatprep.subr.mxu0 0.0
    %222 = vmatpush1.msra.mxu0 0.0
    %223 = vmatprep.subr.mxu0 0.0
    %224 = vmatpush1.msra.mxu0 0.0
    %225 = vmatprep.subr.mxu0 0.0
    %226 = vmatpush1.msra.mxu0 0.0
    %227 = vmatprep.subr.mxu0 0.0
    %228 = vmatpush1.msra.mxu0 0.0
    %229 = vmatprep.subr.mxu0 0.0
    %230 = vmatpush1.msra.mxu0 0.0
    %231 = vmatprep.subr.mxu0 0.0
    %232 = vmatpush1.msra.mxu0 0.0
    %233 = vmatprep.mubr.f32.mxu0 0.0
    %234 = vmatmul.mubr.f32.gmra.mrb[0].mxu0 %v167
    %v235 = vpop.f32.mrb[0].mxu0
    %v236 = vadd.f32 %v162, %v235
    %v237 = vpop.f32.mrb[0].mxu0
    %238 = vdwg.mxu0
    %v239 = vld [vmem:[%s4] sm:$0x1]
    %v241 = vlaneseq
    %v242 = vshrl.u32 %v241, 7
    %v243 = vsub.s32 0, %v242
    %v244 = vrot.slane %v239, %v243
    %v246 = vadd.f32 %v236, %v244
    %vm247 = vcmp.gt.f32.partialorder %v246, 0.0
    %v248 = vmul.f32 %v246, 0.01
    %v249 = vsel %vm247, %v246, %v248
    %v250 = vld [vmem:[#allocation8] sm:$0xff]
    %v251 = vld [vmem:[#allocation8 + $0x8] sm:$0xff]
    %v252 = vld [vmem:[#allocation8 + $0x10] sm:$0xff]
    %v253 = vld [vmem:[#allocation8 + $0x18] sm:$0xff]
    %v254 = vld [vmem:[%s6] sm:$0x1]
    %v256 = vlaneseq
    %v257 = vshrl.u32 %v256, 7
    %v258 = vsub.s32 0, %v257
    %v259 = vrot.slane %v254, %v258
    %vm261 = vcmask 261120
    %v263 = vsel %vm261, %v249, 0
    %265 = vmatprep.subr.mxu0 0.0
    %266 = vmatpush1.msra.mxu0 %v250
    %267 = vmatprep.subr.mxu0 0.0
    %268 = vmatpush1.msra.mxu0 %v251
    %269 = vmatprep.subr.mxu0 0.0
    %270 = vmatpush1.msra.mxu0 %v252
    %271 = vmatprep.subr.mxu0 0.0
    %272 = vmatpush1.msra.mxu0 %v253
    %273 = vmatprep.subr.mxu0 0.0
    %274 = vmatpush1.msra.mxu0 0.0
    %275 = vmatprep.subr.mxu0 0.0
    %276 = vmatpush1.msra.mxu0 0.0
    %277 = vmatprep.subr.mxu0 0.0
    %278 = vmatpush1.msra.mxu0 0.0
    %279 = vmatprep.subr.mxu0 0.0
    %280 = vmatpush1.msra.mxu0 0.0
    %281 = vmatprep.subr.mxu0 0.0
    %282 = vmatpush1.msra.mxu0 0.0
    %283 = vmatprep.subr.mxu0 0.0
    %284 = vmatpush1.msra.mxu0 0.0
    %285 = vmatprep.subr.mxu0 0.0
    %286 = vmatpush1.msra.mxu0 0.0
    %287 = vmatprep.subr.mxu0 0.0
    %288 = vmatpush1.msra.mxu0 0.0
    %289 = vmatprep.subr.mxu0 0.0
    %290 = vmatpush1.msra.mxu0 0.0
    %291 = vmatprep.subr.mxu0 0.0
    %292 = vmatpush1.msra.mxu0 0.0
    %293 = vmatprep.subr.mxu0 0.0
    %294 = vmatpush1.msra.mxu0 0.0
    %295 = vmatprep.subr.mxu0 0.0
    %296 = vmatpush1.msra.mxu0 0.0
    %297 = vmatprep.subr.mxu0 0.0
    %298 = vmatpush1.msra.mxu0 0.0
    %299 = vmatprep.subr.mxu0 0.0
    %300 = vmatpush1.msra.mxu0 0.0
    %301 = vmatprep.subr.mxu0 0.0
    %302 = vmatpush1.msra.mxu0 0.0
    %303 = vmatprep.subr.mxu0 0.0
    %304 = vmatpush1.msra.mxu0 0.0
    %305 = vmatprep.subr.mxu0 0.0
    %306 = vmatpush1.msra.mxu0 0.0
    %307 = vmatprep.subr.mxu0 0.0
    %308 = vmatpush1.msra.mxu0 0.0
    %309 = vmatprep.subr.mxu0 0.0
    %310 = vmatpush1.msra.mxu0 0.0
    %311 = vmatprep.subr.mxu0 0.0
    %312 = vmatpush1.msra.mxu0 0.0
    %313 = vmatprep.subr.mxu0 0.0
    %314 = vmatpush1.msra.mxu0 0.0
    %315 = vmatprep.subr.mxu0 0.0
    %316 = vmatpush1.msra.mxu0 0.0
    %317 = vmatprep.subr.mxu0 0.0
    %318 = vmatpush1.msra.mxu0 0.0
    %319 = vmatprep.subr.mxu0 0.0
    %320 = vmatpush1.msra.mxu0 0.0
    %321 = vmatprep.subr.mxu0 0.0
    %322 = vmatpush1.msra.mxu0 0.0
    %323 = vmatprep.subr.mxu0 0.0
    %324 = vmatpush1.msra.mxu0 0.0
    %325 = vmatprep.subr.mxu0 0.0
    %326 = vmatpush1.msra.mxu0 0.0
    %327 = vmatprep.subr.mxu0 0.0
    %328 = vmatpush1.msra.mxu0 0.0
    %329 = vmatprep.mubr.f32.mxu0 0.0
    %330 = vmatmul.mubr.f32.gmra.mrb[0].mxu0 %v263
    %v331 = vpop.f32.mrb[0].mxu0
    %v332 = vadd.f32 %v259, %v331
    %v333 = vpop.f32.mrb[0].mxu0
    %334 = vdwg.mxu0
    %vm335 = vcmp.gt.f32.partialorder %v332, 0.0
    %v336 = vmul.f32 %v332, 0.01
    %v337 = vsel %vm335, %v332, %v336
    %v338 = vmul.f32 %v337, %v337
    %v339 = vsel %vm261, %v338, 0.0
    %340 = vadd.xlane.f32.xlu0 %v339
    %v341 = vpop.xlane.xlu0 %340
    %v342 = vld [vmem:[%s7] sm:$0x1]
    %v344 = vlaneseq
    %v345 = vshrl.u32 %v344, 7
    %v346 = vsub.s32 0, %v345
    %v347 = vrot.slane %v342, %v346
    %v349 = vmul.f32 %v337, %v347
    %v350 = vsel %vm261, %v349, 0.0
    %351 = vadd.xlane.f32.xlu0 %v350
    %v352 = vpop.xlane.xlu0 %351
    %v353 = vrsqrt.pop %v341
    %v354 = vmul.f32 %v353, %v352
    %v355 = vld [vmem:[#allocation2] sm:$0x1]
    %v357 = vlaneseq
    %v358 = vshrl.u32 %v357, 7
    %v359 = vsub.s32 0, %v358
    %v360 = vrot.slane %v355, %v359
    %v362 = vadd.f32 %v354, %v360
    %vm363 = vcmask 7168
    %364 = vst.msk [vmem:[%s9] sm:$0xff] %vm363, %v362
    // Predicated region
    $region54: #{tpu_custom_call.1} parent=1 // pred_check
      _
    $region55: #{tpu_custom_call.1} parent=1 // pred_check_branch
      %366 = sbr.rel (0) target = $region57
    $region56: #{tpu_custom_call.1} parent=1 // pred_region
      _
    $region57: #{tpu_custom_call.1} parent=1 // pred_fallthru
      _
    // Predicated region
    $region58: #{tpu_custom_call.1} parent=1 // pred_check
      _
    $region59: #{tpu_custom_call.1} parent=1 // pred_check_branch
      %368 = sbr.rel (0) target = $region61
    $region60: #{tpu_custom_call.1} parent=1 // pred_region
      _
    $region61: #{tpu_custom_call.1} parent=1 // pred_fallthru
      _
    %369 = vsyncpa [#allocation4], 1
    %370 = vsyncpa [#allocation6], 1
    %371 = vsyncpa [#allocation9], 1

</llo_original>
